<compile_context>
chip_gen: v5e
topology: v5e:2x2
jax: 0.10.0
libtpu: 0.0.40
codegen_flags: <defaults>
</compile_context>

<pallas_src>
import jax
import jax.numpy as jnp
from jax.experimental import pallas as pl
from jax.experimental.pallas import tpu as pltpu

EPS = 1e-6


def _round_up(v, m):
    return (v + m - 1) // m * m


def _vmem_budgets():
    """(tile-planning budget, CompilerParams vmem_limit) derived from the chip generation."""
    try:
        cap = pltpu.get_tpu_info().vmem_capacity_bytes
    except Exception:
        cap = 64 * 1024 * 1024          # conservative: v7x has the smallest VMEM (64 MiB / TC)
    vmem_limit = int(cap * 3 // 4)      # ~48 MiB on v7x, ~96 MiB on v5e/v6e
    budget = vmem_limit - (6 << 20)     # headroom for Mosaic internal scratch / semaphores
    return max(budget, 8 << 20), vmem_limit


def _plan_tiles(m, d_pad, f_pad, budget_bytes):
    """Pick (TM, TF). TF is None when both bf16 weight matrices fit resident in VMEM."""
    upper_tm = _round_up(max(m, 1), 8)
    cands = [t for t in (512, 256, 128, 64, 32, 16, 8) if t <= upper_tm] or [8]

    # Path 1: whole-F, weights resident once (Buffered(1)).
    w_bytes = 2 * d_pad * f_pad * 2
    if w_bytes <= budget_bytes:
        for tm in cands:
            per_step = (2 * tm * d_pad * 4        # x tile, f32, double-buffered
                        + 2 * tm * d_pad * 4      # out tile, double-buffered (<= f32)
                        + tm * f_pad * 6          # (TM, F) intermediate: f32 + bf16 transient
                        + 2 * tm * d_pad * 4)     # misc (TM, D) temporaries
            if w_bytes + per_step <= budget_bytes:
                return tm, None

    # Path 2: stream F-chunks of W1/W2 (default double-buffering) through an accumulator.
    for tm in cands:
        for tf in (2048, 1024, 512, 256, 128):
            if tf > f_pad or f_pad % tf:
                continue
            w_stream = 2 * 2 * d_pad * tf * 2     # W1/W2 chunks, bf16, Buffered(2)
            per_step = (2 * tm * d_pad * 4
                        + 2 * tm * d_pad * 4
                        + tm * d_pad * 4          # f32 accumulator scratch
                        + tm * tf * 6
                        + 2 * tm * d_pad * 4)
            if w_stream + per_step <= budget_bytes:
                return tm, tf
    return 8, 128


def _layer_norm_rows(z, gamma_row, beta_row, d_true, need_mask):
    # weight * (z - mean) / (std + eps) + bias, std unbiased (torch.std -> 1/(D-1)).
    if need_mask:
        col = jax.lax.broadcasted_iota(jnp.int32, z.shape, 1)
        valid = col < d_true
        zv = jnp.where(valid, z, 0.0)
        mean = jnp.sum(zv, axis=-1, keepdims=True) * (1.0 / d_true)
        cz = jnp.where(valid, z - mean, 0.0)
    else:
        mean = jnp.mean(z, axis=-1, keepdims=True)
        cz = z - mean
    var = jnp.sum(cz * cz, axis=-1, keepdims=True) * (1.0 / max(d_true - 1, 1))
    inv = pl.reciprocal(jnp.sqrt(var) + EPS, approx=True)   # EUP; one reciprocal per row
    return cz * (gamma_row * inv) + beta_row                # gamma fused into the scale


def _make_fused_kernel(d_true, d_pad):
    need_mask = d_pad != d_true

    def kernel(x_ref, w1_ref, b1_ref, w2_ref, b2_ref, g_ref, beta_ref, o_ref):
        x = x_ref[...]                                       # f32: residual + LayerNorm input
        # conv1 (kernel_size=1) == x @ W1 + b1 ; fused ReLU + bf16 cast so the f32
        # (TM, F) intermediate is never kept live.
        hb = jnp.maximum(
            jnp.dot(x.astype(jnp.bfloat16), w1_ref[...],
                    preferred_element_type=jnp.float32) + b1_ref[...],
            0.0).astype(jnp.bfloat16)
        # TODO(synk): dropout is identity (eval mode); training-mode dropout not implemented.
        y = jnp.dot(hb, w2_ref[...], preferred_element_type=jnp.float32) + b2_ref[...]
        z = y + x                                            # residual (padded channels exact 0)
        o_ref[...] = _layer_norm_rows(z, g_ref[...], beta_ref[...],
                                      d_true, need_mask).astype(o_ref.dtype)

    return kernel


def _make_ftiled_kernel(d_true, d_pad):
    need_mask = d_pad != d_true

    def kernel(x_ref, w1_ref, b1_ref, w2_ref, b2_ref, g_ref, beta_ref, o_ref, acc_ref):
        f = pl.program_id(1)

        @pl.when(f == 0)
        def _():
            # Start the accumulator at (residual + conv2 bias): both added exactly once.
            acc_ref[...] = x_ref[...] + b2_ref[...]

        hb = jnp.maximum(
            jnp.dot(x_ref[...].astype(jnp.bfloat16), w1_ref[...],
                    preferred_element_type=jnp.float32) + b1_ref[...],
            0.0).astype(jnp.bfloat16)
        acc_ref[...] += jnp.dot(hb, w2_ref[...], preferred_element_type=jnp.float32)

        @pl.when(f == pl.num_programs(1) - 1)
        def _():
            o_ref[...] = _layer_norm_rows(acc_ref[...], g_ref[...], beta_ref[...],
                                          d_true, need_mask).astype(o_ref.dtype)

    return kernel


def positionwise_ffn(x, w1, b1, w2, b2, gamma, beta, out_dtype=None, _force_tiles=None):
    """x: (B, L, D) f32. w1: (D, F) = conv1.weight[:, :, 0].T, b1: (F,),
    w2: (F, D) = conv2.weight[:, :, 0].T, b2: (D,), gamma/beta: (D,).
    out_dtype: optional narrower output dtype (e.g. bf16); default keeps x.dtype."""
    B, L, D = x.shape
    F = w1.shape[1]
    out_dtype = x.dtype if out_dtype is None else out_dtype

    # Lane-dense channel dims (multiples of 128); zero padding keeps semantics exact.
    D_pad = _round_up(D, 128)
    F_pad = _round_up(F, 128)
    M = B * L

    budget, vmem_limit = _vmem_budgets()
    if _force_tiles is None:
        TM, TF = _plan_tiles(M, D_pad, F_pad, budget)
    else:
        TM, TF = _force_tiles

    # >= 2 row tiles so the "parallel" axis can be split across v7x's two TensorCores.
    while pl.cdiv(M, TM) < 2 and TM > 8:
        TM //= 2
    m_tiles = pl.cdiv(M, TM)

    # Channel padding only; no M padding / slicing — the partial last row tile is
    # masked by Pallas on store (garbage rows never reach HBM).
    xf = x.reshape(M, D)
    if D_pad != D:
        xf = jnp.pad(xf, ((0, 0), (0, D_pad - D)))

    # Weights in bf16 (halves resident VMEM / DMA); biases + LayerNorm params stay f32.
    # TODO(synk): optional fp8 weight path for v7x's fp8 MXU not implemented.
    w1p = jnp.pad(w1, ((0, D_pad - D), (0, F_pad - F))).astype(jnp.bfloat16)
    w2p = jnp.pad(w2, ((0, F_pad - F), (0, D_pad - D))).astype(jnp.bfloat16)
    b1p = jnp.pad(b1, (0, F_pad - F)).reshape(1, F_pad).astype(jnp.float32)
    b2p = jnp.pad(b2, (0, D_pad - D)).reshape(1, D_pad).astype(jnp.float32)
    gp = jnp.pad(gamma, (0, D_pad - D)).reshape(1, D_pad).astype(jnp.float32)
    bp = jnp.pad(beta, (0, D_pad - D)).reshape(1, D_pad).astype(jnp.float32)

    const1 = pl.Buffered(1)   # resident constants: loaded to VMEM once, never re-DMA'd
    out_itemsize = jnp.dtype(out_dtype).itemsize
    flops = 4 * M * D_pad * F_pad
    weight_bytes = (w1p.size + w2p.size) * 2 + (b1p.size + b2p.size + gp.size + bp.size) * 4

    if TF is None:
        grid = (m_tiles,)
        in_specs = [
            pl.BlockSpec((TM, D_pad), lambda i: (i, 0)),                              # x tile
            pl.BlockSpec((D_pad, F_pad), lambda i: (0, 0), pipeline_mode=const1),     # W1
            pl.BlockSpec((1, F_pad), lambda i: (0, 0), pipeline_mode=const1),         # b1
            pl.BlockSpec((F_pad, D_pad), lambda i: (0, 0), pipeline_mode=const1),     # W2
            pl.BlockSpec((1, D_pad), lambda i: (0, 0), pipeline_mode=const1),         # b2
            pl.BlockSpec((1, D_pad), lambda i: (0, 0), pipeline_mode=const1),         # gamma
            pl.BlockSpec((1, D_pad), lambda i: (0, 0), pipeline_mode=const1),         # beta
        ]
        out_spec = pl.BlockSpec((TM, D_pad), lambda i: (i, 0))
        scratch = []
        kernel = _make_fused_kernel(D, D_pad)
        semantics = ("parallel",)
        bytes_accessed = M * D_pad * 4 + M * D_pad * out_itemsize + weight_bytes
    else:
        f_tiles = F_pad // TF
        grid = (m_tiles, f_tiles)
        in_specs = [
            pl.BlockSpec((TM, D_pad), lambda i, f: (i, 0)),                           # x tile
            pl.BlockSpec((D_pad, TF), lambda i, f: (0, f)),                           # W1 chunk
            pl.BlockSpec((1, TF), lambda i, f: (0, f)),                               # b1 chunk
            pl.BlockSpec((TF, D_pad), lambda i, f: (f, 0)),                           # W2 chunk
            pl.BlockSpec((1, D_pad), lambda i, f: (0, 0), pipeline_mode=const1),      # b2
            pl.BlockSpec((1, D_pad), lambda i, f: (0, 0), pipeline_mode=const1),      # gamma
            pl.BlockSpec((1, D_pad), lambda i, f: (0, 0), pipeline_mode=const1),      # beta
        ]
        out_spec = pl.BlockSpec((TM, D_pad), lambda i, f: (i, 0))
        scratch = [pltpu.VMEM((TM, D_pad), jnp.float32)]
        kernel = _make_ftiled_kernel(D, D_pad)
        semantics = ("parallel", "arbitrary")  # F axis reduces into the VMEM accumulator
        bytes_accessed = (M * D_pad * 4 + M * D_pad * out_itemsize
                          + weight_bytes * m_tiles)          # weights re-streamed per row tile

    out = pl.pallas_call(
        kernel,
        out_shape=jax.ShapeDtypeStruct((M, D_pad), out_dtype),
        grid_spec=pltpu.PrefetchScalarGridSpec(
            num_scalar_prefetch=0,
            grid=grid,
            in_specs=in_specs,
            out_specs=out_spec,
            scratch_shapes=scratch,
        ),
        compiler_params=pltpu.CompilerParams(
            dimension_semantics=semantics,
            vmem_limit_bytes=vmem_limit,                     # generation-aware
        ),
        cost_estimate=pl.CostEstimate(
            flops=flops,
            transcendentals=M,                               # one approx reciprocal per row
            bytes_accessed=int(bytes_accessed),
        ),
    )(xf, w1p, b1p, w2p, b2p, gp, bp)

    if D_pad != D:
        out = out[:, :D]
    return out.reshape(B, L, D)


def _reference_f32(x, w1, b1, w2, b2, gamma, beta):
    # Pure-f32 mirror of the PyTorch module (eval mode).
    h = jnp.maximum(jnp.einsum("bld,df->blf", x, w1) + b1, 0.0)
    y = jnp.einsum("blf,fd->bld", h, w2) + b2
    z = y + x
    mean = jnp.mean(z, axis=-1, keepdims=True)
    std = jnp.sqrt(jnp.sum((z - mean) ** 2, axis=-1, keepdims=True) / (z.shape[-1] - 1))
    return gamma * (z - mean) / (std + EPS) + beta


def _reference_bf16(x, w1, b1, w2, b2, gamma, beta):
    # Mirrors the kernel's bf16 MXU operand casts; everything else identical to PyTorch (f32).
    h = jnp.einsum("bld,df->blf", x.astype(jnp.bfloat16), w1.astype(jnp.bfloat16),
                   preferred_element_type=jnp.float32) + b1
    h = jnp.maximum(h, 0.0)
    y = jnp.einsum("blf,fd->bld", h.astype(jnp.bfloat16), w2.astype(jnp.bfloat16),
                   preferred_element_type=jnp.float32) + b2
    z = y + x
    mean = jnp.mean(z, axis=-1, keepdims=True)
    std = jnp.sqrt(jnp.sum((z - mean) ** 2, axis=-1, keepdims=True) / (z.shape[-1] - 1))
    return gamma * (z - mean) / (std + EPS) + beta


if __name__ == "__main__":
    key = jax.random.PRNGKey(0)

    def make_params(k, d_model, d_ff):
        kw1, kb1, kw2, kb2 = jax.random.split(k, 4)
        lim1 = 1.0 / (d_model ** 0.5)
        lim2 = 1.0 / (d_ff ** 0.5)
        # Stored pre-transposed: w1 is (d_model, d_ff) == conv1.weight[:, :, 0].T
        w1 = jax.random.uniform(kw1, (d_model, d_ff), minval=-lim1, maxval=lim1, dtype=jnp.float32)
        b1 = jax.random.uniform(kb1, (d_ff,), minval=-lim1, maxval=lim1, dtype=jnp.float32)
        w2 = jax.random.uniform(kw2, (d_ff, d_model), minval=-lim2, maxval=lim2, dtype=jnp.float32)
        b2 = jax.random.uniform(kb2, (d_model,), minval=-lim2, maxval=lim2, dtype=jnp.float32)
        gamma = jnp.ones((d_model,), dtype=jnp.float32)
        beta = jnp.zeros((d_model,), dtype=jnp.float32)
        return w1, b1, w2, b2, gamma, beta

    k1, k2, kx1, kx2 = jax.random.split(key, 4)

    # --- Test 1: fused single-pass path (weights resident) ---
    B, L, d_model, d_ff = 2, 16, 32, 64
    x = jax.random.normal(kx1, (B, L, d_model), dtype=jnp.float32)
    params = make_params(k1, d_model, d_ff)
    out = jax.block_until_ready(positionwise_ffn(x, *params))
    assert out.shape == (B, L, d_model)
    assert jnp.allclose(out, _reference_bf16(x, *params), atol=2e-2, rtol=2e-2), \
        "fused path: mismatch vs bf16-matmul reference"
    assert jnp.allclose(out, _reference_f32(x, *params), atol=1e-1, rtol=1e-1), \
        "fused path: mismatch vs f32 reference"

    # --- Test 2: F-tiled accumulator path + partial (masked) last row tile ---
    B, L, d_model, d_ff = 2, 20, 32, 256        # M=40 not a multiple of TM=16; 2 F-chunks
    x = jax.random.normal(kx2, (B, L, d_model), dtype=jnp.float32)
    params = make_params(k2, d_model, d_ff)
    out = jax.block_until_ready(positionwise_ffn(x, *params, _force_tiles=(16, 128)))
    assert out.shape == (B, L, d_model)
    assert jnp.allclose(out, _reference_bf16(x, *params), atol=2e-2, rtol=2e-2), \
        "F-tiled path: mismatch vs bf16-matmul reference"
    assert jnp.allclose(out, _reference_f32(x, *params), atol=1e-1, rtol=1e-1), \
        "F-tiled path: mismatch vs f32 reference"

    print("KERNEL_OK")
</pallas_src>

<mosaic_0001>
module attributes {stable_mosaic.version = 11 : i64} {
  func.func @kernel(%arg0: i32, %arg1: memref<16x128xf32, #tpu.memory_space<vmem>>, %arg2: memref<128x128xbf16, #tpu.memory_space<vmem>>, %arg3: memref<1x128xf32, #tpu.memory_space<vmem>>, %arg4: memref<128x128xbf16, #tpu.memory_space<vmem>>, %arg5: memref<1x128xf32, #tpu.memory_space<vmem>>, %arg6: memref<1x128xf32, #tpu.memory_space<vmem>>, %arg7: memref<1x128xf32, #tpu.memory_space<vmem>>, %arg8: memref<16x128xf32, #tpu.memory_space<vmem>>) attributes {dimension_semantics = [#tpu.dimension_semantics<parallel>], iteration_bounds = array<i64: 2>, scalar_prefetch = 0 : i64, scratch_operands = 0 : i64, tpu.core_type = #tpu.core_type<tc>, window_params = [{transform_indices = @transform_0, window_bounds = array<i64: 16, 128>}, {pipeline_mode = #tpu.pipeline_mode<synchronous>, transform_indices = @transform_1, window_bounds = array<i64: 128, 128>}, {pipeline_mode = #tpu.pipeline_mode<synchronous>, transform_indices = @transform_2, window_bounds = array<i64: 1, 128>}, {pipeline_mode = #tpu.pipeline_mode<synchronous>, transform_indices = @transform_3, window_bounds = array<i64: 128, 128>}, {pipeline_mode = #tpu.pipeline_mode<synchronous>, transform_indices = @transform_4, window_bounds = array<i64: 1, 128>}, {pipeline_mode = #tpu.pipeline_mode<synchronous>, transform_indices = @transform_5, window_bounds = array<i64: 1, 128>}, {pipeline_mode = #tpu.pipeline_mode<synchronous>, transform_indices = @transform_6, window_bounds = array<i64: 1, 128>}, {transform_indices = @transform_7, window_bounds = array<i64: 16, 128>}]} {
    %c0 = arith.constant 0 : index
    %c0_0 = arith.constant 0 : index
    %0 = vector.load %arg1[%c0, %c0_0] : memref<16x128xf32, #tpu.memory_space<vmem>>, vector<16x128xf32>
    %1 = arith.truncf %0 : vector<16x128xf32> to vector<16x128xbf16>
    %c0_1 = arith.constant 0 : index
    %c0_2 = arith.constant 0 : index
    %2 = vector.load %arg2[%c0_1, %c0_2] : memref<128x128xbf16, #tpu.memory_space<vmem>>, vector<128x128xbf16>
    %cst = arith.constant dense<0.000000e+00> : vector<16x128xf32>
    %3 = tpu.matmul %1, %2, %cst {dimension_numbers = #tpu.dot_dimension_numbers<[1], [0], [0], [1], [0, 0, 1, 1], [], []>} : vector<16x128xbf16>, vector<128x128xbf16>, vector<16x128xf32> -> vector<16x128xf32>
    %c0_3 = arith.constant 0 : index
    %c0_4 = arith.constant 0 : index
    %4 = vector.load %arg3[%c0_3, %c0_4] : memref<1x128xf32, #tpu.memory_space<vmem>>, vector<1x128xf32>
    %5 = vector.broadcast %4 : vector<1x128xf32> to vector<16x128xf32>
    %6 = arith.addf %3, %5 : vector<16x128xf32>
    %cst_5 = arith.constant 0.000000e+00 : f32
    %7 = vector.broadcast %cst_5 : f32 to vector<16x128xf32>
    %8 = arith.maximumf %6, %7 : vector<16x128xf32>
    %9 = arith.truncf %8 : vector<16x128xf32> to vector<16x128xbf16>
    %c0_6 = arith.constant 0 : index
    %c0_7 = arith.constant 0 : index
    %10 = vector.load %arg4[%c0_6, %c0_7] : memref<128x128xbf16, #tpu.memory_space<vmem>>, vector<128x128xbf16>
    %cst_8 = arith.constant dense<0.000000e+00> : vector<16x128xf32>
    %11 = tpu.matmul %9, %10, %cst_8 {dimension_numbers = #tpu.dot_dimension_numbers<[1], [0], [0], [1], [0, 0, 1, 1], [], []>} : vector<16x128xbf16>, vector<128x128xbf16>, vector<16x128xf32> -> vector<16x128xf32>
    %c0_9 = arith.constant 0 : index
    %c0_10 = arith.constant 0 : index
    %12 = vector.load %arg5[%c0_9, %c0_10] : memref<1x128xf32, #tpu.memory_space<vmem>>, vector<1x128xf32>
    %13 = vector.broadcast %12 : vector<1x128xf32> to vector<16x128xf32>
    %14 = arith.addf %11, %13 : vector<16x128xf32>
    %15 = arith.addf %14, %0 : vector<16x128xf32>
    %c0_11 = arith.constant 0 : index
    %c0_12 = arith.constant 0 : index
    %16 = vector.load %arg6[%c0_11, %c0_12] : memref<1x128xf32, #tpu.memory_space<vmem>>, vector<1x128xf32>
    %c0_13 = arith.constant 0 : index
    %c0_14 = arith.constant 0 : index
    %17 = vector.load %arg7[%c0_13, %c0_14] : memref<1x128xf32, #tpu.memory_space<vmem>>, vector<1x128xf32>
    %18 = tpu.iota {dimensions = array<i32: 1>} : vector<16x128xi32>
    %c32_i32 = arith.constant 32 : i32
    %19 = vector.broadcast %c32_i32 : i32 to vector<16x128xi32>
    %20 = arith.cmpi slt, %18, %19 : vector<16x128xi32>
    %cst_15 = arith.constant 0.000000e+00 : f32
    %21 = vector.broadcast %cst_15 : f32 to vector<16x128xf32>
    %22 = arith.select %20, %15, %21 : vector<16x128xi1>, vector<16x128xf32>
    %cst_16 = arith.constant dense<0.000000e+00> : vector<16xf32>
    %23 = vector.multi_reduction <add>, %22, %cst_16 [1] : vector<16x128xf32> to vector<16xf32>
    %24 = vector.shape_cast %23 : vector<16xf32> to vector<16x1xf32>
    %cst_17 = arith.constant 3.125000e-02 : f32
    %25 = vector.broadcast %cst_17 : f32 to vector<16x1xf32>
    %26 = arith.mulf %24, %25 : vector<16x1xf32>
    %27 = vector.broadcast %26 : vector<16x1xf32> to vector<16x128xf32>
    %28 = arith.subf %15, %27 : vector<16x128xf32>
    %cst_18 = arith.constant 0.000000e+00 : f32
    %29 = vector.broadcast %cst_18 : f32 to vector<16x128xf32>
    %30 = arith.select %20, %28, %29 : vector<16x128xi1>, vector<16x128xf32>
    %31 = arith.mulf %30, %30 : vector<16x128xf32>
    %cst_19 = arith.constant dense<0.000000e+00> : vector<16xf32>
    %32 = vector.multi_reduction <add>, %31, %cst_19 [1] : vector<16x128xf32> to vector<16xf32>
    %33 = vector.shape_cast %32 : vector<16xf32> to vector<16x1xf32>
    %cst_20 = arith.constant 0.0322580636 : f32
    %34 = vector.broadcast %cst_20 : f32 to vector<16x1xf32>
    %35 = arith.mulf %33, %34 : vector<16x1xf32>
    %36 = math.sqrt %35 : vector<16x1xf32>
    %cst_21 = arith.constant 9.99999997E-7 : f32
    %37 = vector.broadcast %cst_21 : f32 to vector<16x1xf32>
    %38 = arith.addf %36, %37 : vector<16x1xf32>
    %39 = tpu.reciprocal %38 {approx = true} : vector<16x1xf32> -> vector<16x1xf32>
    %40 = vector.broadcast %16 : vector<1x128xf32> to vector<16x128xf32>
    %41 = vector.broadcast %39 : vector<16x1xf32> to vector<16x128xf32>
    %42 = arith.mulf %40, %41 : vector<16x128xf32>
    %43 = arith.mulf %30, %42 : vector<16x128xf32>
    %44 = vector.broadcast %17 : vector<1x128xf32> to vector<16x128xf32>
    %45 = arith.addf %43, %44 : vector<16x128xf32>
    %c0_22 = arith.constant 0 : index
    %c0_23 = arith.constant 0 : index
    %46 = vector.load %arg8[%c0_22, %c0_23] : memref<16x128xf32, #tpu.memory_space<vmem>>, vector<16x128xf32>
    tpu.vector_store %arg8[%c0_22, %c0_23], %45 {strides = array<i32>} : memref<16x128xf32, #tpu.memory_space<vmem>>, vector<16x128xf32>,
    return
  }
  func.func @transform_0(%arg0: i32) -> (i32, i32) {
    %c0_i32 = arith.constant 0 : i32
    %c0_i32_0 = arith.constant 0 : i32
    return %arg0, %c0_i32 : i32, i32
  }
  func.func @transform_1(%arg0: i32) -> (i32, i32) {
    %c0_i32 = arith.constant 0 : i32
    %c0_i32_0 = arith.constant 0 : i32
    %c0_i32_1 = arith.constant 0 : i32
    return %c0_i32, %c0_i32_0 : i32, i32
  }
  func.func @transform_2(%arg0: i32) -> (i32, i32) {
    %c0_i32 = arith.constant 0 : i32
    %c0_i32_0 = arith.constant 0 : i32
    %c0_i32_1 = arith.constant 0 : i32
    return %c0_i32, %c0_i32_0 : i32, i32
  }
  func.func @transform_3(%arg0: i32) -> (i32, i32) {
    %c0_i32 = arith.constant 0 : i32
    %c0_i32_0 = arith.constant 0 : i32
    %c0_i32_1 = arith.constant 0 : i32
    return %c0_i32, %c0_i32_0 : i32, i32
  }
  func.func @transform_4(%arg0: i32) -> (i32, i32) {
    %c0_i32 = arith.constant 0 : i32
    %c0_i32_0 = arith.constant 0 : i32
    %c0_i32_1 = arith.constant 0 : i32
    return %c0_i32, %c0_i32_0 : i32, i32
  }
  func.func @transform_5(%arg0: i32) -> (i32, i32) {
    %c0_i32 = arith.constant 0 : i32
    %c0_i32_0 = arith.constant 0 : i32
    %c0_i32_1 = arith.constant 0 : i32
    return %c0_i32, %c0_i32_0 : i32, i32
  }
  func.func @transform_6(%arg0: i32) -> (i32, i32) {
    %c0_i32 = arith.constant 0 : i32
    %c0_i32_0 = arith.constant 0 : i32
    %c0_i32_1 = arith.constant 0 : i32
    return %c0_i32, %c0_i32_0 : i32, i32
  }
  func.func @transform_7(%arg0: i32) -> (i32, i32) {
    %c0_i32 = arith.constant 0 : i32
    %c0_i32_0 = arith.constant 0 : i32
    return %arg0, %c0_i32 : i32, i32
  }
}

</mosaic_0001>

<llo_original>
// kernel: tpu_custom_call.1
$region0: #{tpu_custom_call.1}
  #allocation0 [shape = 'u32[]', space=smem, size = 0x4, offset = 0x4, fixed_abs, tag = 'smem constant byte address 0x4 - core index']
  #allocation1 [shape = 'u32[72,128]{1,0:T(1,128)}', space=vmem, size = 0x9000, scoped, tag = 'internal scratch']
  %s0 = inlined_call_operand.hbm [shape: f32[32,128], index: 0, kind: input, shape index: {}]
  %s1 = inlined_call_operand.hbm [shape: bf16[128,128], index: 1, kind: input, shape index: {}]
  %s2 = inlined_call_operand.vmem [shape: f32[1,128], index: 2, kind: input, shape index: {}]
  %s3 = inlined_call_operand.hbm [shape: bf16[128,128], index: 3, kind: input, shape index: {}]
  %s4 = inlined_call_operand.vmem [shape: f32[1,128], index: 4, kind: input, shape index: {}]
  %s5 = inlined_call_operand.vmem [shape: f32[1,128], index: 5, kind: input, shape index: {}]
  %s6 = inlined_call_operand.vmem [shape: f32[1,128], index: 6, kind: input, shape index: {}]
  %s7 = inlined_call_operand.hbm [shape: f32[32,128], index: 7, kind: output, shape index: {}]
  %s8 = sld [smem:[#allocation0]]
  $region73: #{tpu_custom_call.1} parent=0
    _
  %s10 = ssub.s32 1, %s8
  %s11 = scalar_select 0, %s10, %s8
  $region1: #{tpu_custom_call.1} parent=0
    #allocation2 [shape = 'u8[16384]{0}', space=vmem, size = 0x4000, scoped, tag = 'input window, operand 0']
    #allocation3 [shape = 's32[2]{0}', space=sflag, size = 0x8, scoped, tag = 'scoped memory for tpu_custom_call.1']
    #allocation4 [shape = 's32[2]{0}', space=sflag, size = 0x8, scoped, tag = 'scoped memory for tpu_custom_call.1']
    #allocation5 [shape = 'u8[32768]{0}', space=vmem, size = 0x8000, scoped, tag = 'input window, operand 1, single buffered']
    #allocation6 [shape = 's32[1]{0}', space=sflag, size = 0x4, scoped, tag = 'scoped memory for tpu_custom_call.1']
    #allocation7 [shape = 'u8[32768]{0}', space=vmem, size = 0x8000, scoped, tag = 'input window, operand 3, single buffered']
    #allocation8 [shape = 'u8[16384]{0}', space=vmem, size = 0x4000, scoped, tag = 'output window, operand 0']
    %12 = vsyncpa [#allocation3], 0
    %s13 = scalar_lea.sflag [#allocation3], 1
    %14 = vsyncpa %s13, 0
    %15 = vsyncpa [#allocation6], 0
    %16 = vsyncpa [#allocation4], 0
    %s17 = scalar_lea.sflag [#allocation4], 1
    %18 = vsyncpa %s17, 0
    loop: start=0, step=1, limit=4
    $region2: #{tpu_custom_call.1} parent=1 // loop_pre_header
      _
    $region3: #{tpu_custom_call.1} parent=1 // loop_header
      %s20 = sphi 0, %s24
      %p21 = scmp.ge.s32.totalorder %s20, 4
      %s30 = sphi 0, %s32
      %s33 = sphi 0, %s30
      %s34 = sphi 0, %s33
      %s50 = sphi 0, %s34
      %s54 = sphi 0, %s54
      %s56 = sphi 0, %s54
      %s57 = sphi 0, %s56
      %s71 = sphi 0, %s57
      %s75 = sphi 0, %s75
      %s77 = sphi 0, %s75
      %s78 = sphi 0, %s77
      %s92 = sphi 0, %s78
      %s96 = sphi 0, %s96
      %s98 = sphi 0, %s96
      %s99 = sphi 0, %s98
      %s113 = sphi 0, %s99
      %s117 = sphi 0, %s117
      %s119 = sphi 0, %s117
      %s120 = sphi 0, %s119
      %s134 = sphi 0, %s120
      %s138 = sphi 0, %s138
      %s140 = sphi 0, %s138
      %s141 = sphi 0, %s140
      %s155 = sphi 0, %s141
      %s159 = sphi 0, %s159
      %s161 = sphi 0, %s159
      %s162 = sphi 0, %s161
      %s176 = sphi 0, %s162
      %s182 = sphi 0, %s184
      %s185 = sphi 0, %s182
      %s186 = sphi 0, %s185
      %s202 = sphi 0, %s186
    $region4: #{tpu_custom_call.1} parent=1 // loop_header_branch
      %23 = sbr.rel (%p21) target = $region8
    $region5: #{tpu_custom_call.1} parent=1 // loop_body
      %s25 = ssub.s32 %s20, 1
      %s26 = ssub.s32 %s20, 2
      %s27 = sadd.s32 %s20, 1
      %s28 = ssub.s32 %s20, %s27
      %p29 = scmp.eq.s32.totalorder %s28, 0
      %s31 = sadd.s32 %s30, 1
      %s32 = scalar_select %p29, %s30, %s31
      %p35 = pneg %p29
      %p36 = scmp.eq.s32.totalorder %s20, 1
      %p37 = por %p35, %p36
      %p38 = scmp.ne.s32.totalorder %s30, %s33
      %p39 = scmp.eq.s32.totalorder %s20, 0
      %p40 = por %p38, %p39
      %p41 = scmp.ne.s32.totalorder %s30, %s33
      %p42 = scmp.eq.s32.totalorder %s25, 1
      %p43 = por %p41, %p42
      %p44 = scmp.ne.s32.totalorder %s33, %s34
      %p45 = scmp.eq.s32.totalorder %s25, 0
      %p46 = por %p44, %p45
      %p47 = scmp.ne.s32.totalorder %s33, %s34
      %p48 = scmp.eq.s32.totalorder %s26, 1
      %p49 = por %p47, %p48
      %p51 = scmp.ne.s32.totalorder %s34, %s50
      %p52 = scmp.eq.s32.totalorder %s26, 0
      %p53 = por %p51, %p52
      %s55 = sadd.s32 %s54, 1
      %p58 = scmp.eq.s32.totalorder %s20, 1
      %p59 = scmp.ne.s32.totalorder %s54, %s56
      %p60 = scmp.eq.s32.totalorder %s20, 0
      %p61 = por %p59, %p60
      %p62 = scmp.ne.s32.totalorder %s54, %s56
      %p63 = scmp.eq.s32.totalorder %s25, 1
      %p64 = por %p62, %p63
      %p65 = scmp.ne.s32.totalorder %s56, %s57
      %p66 = scmp.eq.s32.totalorder %s25, 0
      %p67 = por %p65, %p66
      %p68 = scmp.ne.s32.totalorder %s56, %s57
      %p69 = scmp.eq.s32.totalorder %s26, 1
      %p70 = por %p68, %p69
      %p72 = scmp.ne.s32.totalorder %s57, %s71
      %p73 = scmp.eq.s32.totalorder %s26, 0
      %p74 = por %p72, %p73
      %s76 = sadd.s32 %s75, 1
      %p79 = scmp.eq.s32.totalorder %s20, 1
      %p80 = scmp.ne.s32.totalorder %s75, %s77
      %p81 = scmp.eq.s32.totalorder %s20, 0
      %p82 = por %p80, %p81
      %p83 = scmp.ne.s32.totalorder %s75, %s77
      %p84 = scmp.eq.s32.totalorder %s25, 1
      %p85 = por %p83, %p84
      %p86 = scmp.ne.s32.totalorder %s77, %s78
      %p87 = scmp.eq.s32.totalorder %s25, 0
      %p88 = por %p86, %p87
      %p89 = scmp.ne.s32.totalorder %s77, %s78
      %p90 = scmp.eq.s32.totalorder %s26, 1
      %p91 = por %p89, %p90
      %p93 = scmp.ne.s32.totalorder %s78, %s92
      %p94 = scmp.eq.s32.totalorder %s26, 0
      %p95 = por %p93, %p94
      %s97 = sadd.s32 %s96, 1
      %p100 = scmp.eq.s32.totalorder %s20, 1
      %p101 = scmp.ne.s32.totalorder %s96, %s98
      %p102 = scmp.eq.s32.totalorder %s20, 0
      %p103 = por %p101, %p102
      %p104 = scmp.ne.s32.totalorder %s96, %s98
      %p105 = scmp.eq.s32.totalorder %s25, 1
      %p106 = por %p104, %p105
      %p107 = scmp.ne.s32.totalorder %s98, %s99
      %p108 = scmp.eq.s32.totalorder %s25, 0
      %p109 = por %p107, %p108
      %p110 = scmp.ne.s32.totalorder %s98, %s99
      %p111 = scmp.eq.s32.totalorder %s26, 1
      %p112 = por %p110, %p111
      %p114 = scmp.ne.s32.totalorder %s99, %s113
      %p115 = scmp.eq.s32.totalorder %s26, 0
      %p116 = por %p114, %p115
      %s118 = sadd.s32 %s117, 1
      %p121 = scmp.eq.s32.totalorder %s20, 1
      %p122 = scmp.ne.s32.totalorder %s117, %s119
      %p123 = scmp.eq.s32.totalorder %s20, 0
      %p124 = por %p122, %p123
      %p125 = scmp.ne.s32.totalorder %s117, %s119
      %p126 = scmp.eq.s32.totalorder %s25, 1
      %p127 = por %p125, %p126
      %p128 = scmp.ne.s32.totalorder %s119, %s120
      %p129 = scmp.eq.s32.totalorder %s25, 0
      %p130 = por %p128, %p129
      %p131 = scmp.ne.s32.totalorder %s119, %s120
      %p132 = scmp.eq.s32.totalorder %s26, 1
      %p133 = por %p131, %p132
      %p135 = scmp.ne.s32.totalorder %s120, %s134
      %p136 = scmp.eq.s32.totalorder %s26, 0
      %p137 = por %p135, %p136
      %s139 = sadd.s32 %s138, 1
      %p142 = scmp.eq.s32.totalorder %s20, 1
      %p143 = scmp.ne.s32.totalorder %s138, %s140
      %p144 = scmp.eq.s32.totalorder %s20, 0
      %p145 = por %p143, %p144
      %p146 = scmp.ne.s32.totalorder %s138, %s140
      %p147 = scmp.eq.s32.totalorder %s25, 1
      %p148 = por %p146, %p147
      %p149 = scmp.ne.s32.totalorder %s140, %s141
      %p150 = scmp.eq.s32.totalorder %s25, 0
      %p151 = por %p149, %p150
      %p152 = scmp.ne.s32.totalorder %s140, %s141
      %p153 = scmp.eq.s32.totalorder %s26, 1
      %p154 = por %p152, %p153
      %p156 = scmp.ne.s32.totalorder %s141, %s155
      %p157 = scmp.eq.s32.totalorder %s26, 0
      %p158 = por %p156, %p157
      %s160 = sadd.s32 %s159, 1
      %p163 = scmp.eq.s32.totalorder %s20, 1
      %p164 = scmp.ne.s32.totalorder %s159, %s161
      %p165 = scmp.eq.s32.totalorder %s20, 0
      %p166 = por %p164, %p165
      %p167 = scmp.ne.s32.totalorder %s159, %s161
      %p168 = scmp.eq.s32.totalorder %s25, 1
      %p169 = por %p167, %p168
      %p170 = scmp.ne.s32.totalorder %s161, %s162
      %p171 = scmp.eq.s32.totalorder %s25, 0
      %p172 = por %p170, %p171
      %p173 = scmp.ne.s32.totalorder %s161, %s162
      %p174 = scmp.eq.s32.totalorder %s26, 1
      %p175 = por %p173, %p174
      %p177 = scmp.ne.s32.totalorder %s162, %s176
      %p178 = scmp.eq.s32.totalorder %s26, 0
      %p179 = por %p177, %p178
      %s180 = ssub.s32 %s20, %s27
      %p181 = scmp.eq.s32.totalorder %s180, 0
      %s183 = sadd.s32 %s182, 1
      %s184 = scalar_select %p181, %s182, %s183
      %p187 = pneg %p181
      %p188 = scmp.eq.s32.totalorder %s20, 1
      %p189 = por %p187, %p188
      %p190 = scmp.ne.s32.totalorder %s182, %s185
      %p191 = scmp.eq.s32.totalorder %s20, 0
      %p192 = por %p190, %p191
      %p193 = scmp.ne.s32.totalorder %s182, %s185
      %p194 = scmp.eq.s32.totalorder %s25, 1
      %p195 = por %p193, %p194
      %p196 = scmp.ne.s32.totalorder %s185, %s186
      %p197 = scmp.eq.s32.totalorder %s25, 0
      %p198 = por %p196, %p197
      %p199 = scmp.ne.s32.totalorder %s185, %s186
      %p200 = scmp.eq.s32.totalorder %s26, 1
      %p201 = por %p199, %p200
      %p203 = scmp.ne.s32.totalorder %s186, %s202
      %p204 = scmp.eq.s32.totalorder %s26, 0
      %p205 = por %p203, %p204
      %p206 = scmp.le.s32.totalorder 1, %s20
      %p207 = scmp.lt.s32.totalorder %s20, 3
      %p208 = pnand %p206, %p207
      %p209 = pneg %p208
      // Predicated region
      $region9: #{tpu_custom_call.1} parent=5 // pred_check
        _
      $region10: #{tpu_custom_call.1} parent=5 // pred_check_branch
        %211 = sbr.rel (%p208) target = $region12
      $region11: #{tpu_custom_call.1} parent=5 // pred_region
        %s212 = ssub.s32 %s20, 1
        // Predicated region
        $region13: #{tpu_custom_call.1} parent=11 // pred_check
          %p213 = pneg %p67
        $region14: #{tpu_custom_call.1} parent=11 // pred_check_branch
          %215 = sbr.rel (%p213) target = $region16
        $region15: #{tpu_custom_call.1} parent=11 // pred_region
          %217 = vsyncadd [#allocation6], 0
          %s218 = sshll.u32 %s1, 4
          %s219 = int_to_ptr.hbm [resolvable:$true] %s218
          %s220 = sshll.u32 [#allocation5], 4
          %s221 = int_to_ptr.vmem [resolvable:$true] %s220
          %226 = dma.hbm_to_vmem [thread:$0]  %s219, 1024, %s221, [#allocation6], 64, 64, 4
        $region16: #{tpu_custom_call.1} parent=11 // pred_fallthru
          _
        // Predicated region
        $region17: #{tpu_custom_call.1} parent=11 // pred_check
          %p227 = pneg %p88
        $region18: #{tpu_custom_call.1} parent=11 // pred_check_branch
          %229 = sbr.rel (%p227) target = $region20
        $region19: #{tpu_custom_call.1} parent=11 // pred_region
          _
        $region20: #{tpu_custom_call.1} parent=11 // pred_fallthru
          _
        // Predicated region
        $region21: #{tpu_custom_call.1} parent=11 // pred_check
          %p230 = pneg %p109
        $region22: #{tpu_custom_call.1} parent=11 // pred_check_branch
          %232 = sbr.rel (%p230) target = $region24
        $region23: #{tpu_custom_call.1} parent=11 // pred_region
          %234 = vsyncadd [#allocation6], 0
          %s235 = sshll.u32 %s3, 4
          %s236 = int_to_ptr.hbm [resolvable:$true] %s235
          %s237 = sshll.u32 [#allocation7], 4
          %s238 = int_to_ptr.vmem [resolvable:$true] %s237
          %243 = dma.hbm_to_vmem [thread:$0]  %s236, 1024, %s238, [#allocation6], 64, 64, 4
        $region24: #{tpu_custom_call.1} parent=11 // pred_fallthru
          _
        // Predicated region
        $region25: #{tpu_custom_call.1} parent=11 // pred_check
          %p244 = pneg %p130
        $region26: #{tpu_custom_call.1} parent=11 // pred_check_branch
          %246 = sbr.rel (%p244) target = $region28
        $region27: #{tpu_custom_call.1} parent=11 // pred_region
          _
        $region28: #{tpu_custom_call.1} parent=11 // pred_fallthru
          _
        // Predicated region
        $region29: #{tpu_custom_call.1} parent=11 // pred_check
          %p247 = pneg %p151
        $region30: #{tpu_custom_call.1} parent=11 // pred_check_branch
          %249 = sbr.rel (%p247) target = $region32
        $region31: #{tpu_custom_call.1} parent=11 // pred_region
          _
        $region32: #{tpu_custom_call.1} parent=11 // pred_fallthru
          _
        // Predicated region
        $region33: #{tpu_custom_call.1} parent=11 // pred_check
          %p250 = pneg %p172
        $region34: #{tpu_custom_call.1} parent=11 // pred_check_branch
          %252 = sbr.rel (%p250) target = $region36
        $region35: #{tpu_custom_call.1} parent=11 // pred_region
          _
        $region36: #{tpu_custom_call.1} parent=11 // pred_fallthru
          _
      $region12: #{tpu_custom_call.1} parent=5 // pred_fallthru
        _
      %p253 = scmp.lt.s32.totalorder %s20, 2
      // Predicated region
      $region37: #{tpu_custom_call.1} parent=5 // pred_check
        %p254 = pneg %p253
      $region38: #{tpu_custom_call.1} parent=5 // pred_check_branch
        %256 = sbr.rel (%p254) target = $region40
      $region39: #{tpu_custom_call.1} parent=5 // pred_region
        // Predicated region
        $region41: #{tpu_custom_call.1} parent=39 // pred_check
          %p257 = pneg %p40
        $region42: #{tpu_custom_call.1} parent=39 // pred_check_branch
          %259 = sbr.rel (%p257) target = $region44
        $region43: #{tpu_custom_call.1} parent=39 // pred_region
          %s260 = sand.u32 %s30, 1
          %s261 = scalar_lea.sflag [#allocation3], %s260
          %s262 = sand.u32 %s30, 1
          %s263 = smul.addr %s262, 16
          %s264 = scalar_lea.vmem [#allocation2], %s263
          %s265 = smul.u32 2, %s20
          %267 = vsyncadd %s261, 0
          %s268 = smul.addr %s265, 8
          %s269 = scalar_lea.hbm %s0, %s268
          %s270 = sshll.u32 %s269, 4
          %s271 = int_to_ptr.hbm [resolvable:$true] %s270
          %s272 = sshll.u32 %s264, 4
          %s273 = int_to_ptr.vmem [resolvable:$true] %s272
          %278 = dma.hbm_to_vmem [thread:$0]  %s271, 256, %s273, %s261, 128, 128, 8
        $region44: #{tpu_custom_call.1} parent=39 // pred_fallthru
          _
      $region40: #{tpu_custom_call.1} parent=5 // pred_fallthru
        _
      %p279 = scmp.le.s32.totalorder 1, %s20
      %p280 = scmp.lt.s32.totalorder %s20, 3
      %p281 = pnand %p279, %p280
      %p282 = pneg %p281
      // Predicated region
      $region45: #{tpu_custom_call.1} parent=5 // pred_check
        _
      $region46: #{tpu_custom_call.1} parent=5 // pred_check_branch
        %284 = sbr.rel (%p281) target = $region48
      $region47: #{tpu_custom_call.1} parent=5 // pred_region
        %s285 = ssub.s32 %s20, 1
        %s286 = sand.u32 %s33, 1
        %s287 = scalar_lea.sflag [#allocation3], %s286
        %s288 = sand.u32 %s33, 1
        %s289 = smul.addr %s288, 16
        %s290 = scalar_lea.vmem [#allocation2], %s289
        // Predicated region
        $region49: #{tpu_custom_call.1} parent=47 // pred_check
          %p291 = pneg %p46
        $region50: #{tpu_custom_call.1} parent=47 // pred_check_branch
          %293 = sbr.rel (%p291) target = $region52
        $region51: #{tpu_custom_call.1} parent=47 // pred_region
          %295 = dma.done %s287, 256
        $region52: #{tpu_custom_call.1} parent=47 // pred_fallthru
          _
        // Predicated region
        $region53: #{tpu_custom_call.1} parent=47 // pred_check
          %p296 = pneg %p67
        $region54: #{tpu_custom_call.1} parent=47 // pred_check_branch
          %298 = sbr.rel (%p296) target = $region56
        $region55: #{tpu_custom_call.1} parent=47 // pred_region
          %300 = dma.done [#allocation6], 1024
        $region56: #{tpu_custom_call.1} parent=47 // pred_fallthru
          _
        // Predicated region
        $region57: #{tpu_custom_call.1} parent=47 // pred_check
          %p301 = pneg %p109
        $region58: #{tpu_custom_call.1} parent=47 // pred_check_branch
          %303 = sbr.rel (%p301) target = $region60
        $region59: #{tpu_custom_call.1} parent=47 // pred_region
          %305 = dma.done [#allocation6], 1024
        $region60: #{tpu_custom_call.1} parent=47 // pred_fallthru
          _
        %s306 = sand.u32 %s33, 1
        %s307 = scalar_lea.sflag [#allocation3], %s306
        %s308 = sand.u32 %s33, 1
        %s309 = smul.addr %s308, 16
        %s310 = scalar_lea.vmem [#allocation2], %s309
        %p311 = pneg %p46
        %p312 = pneg %p43
        %p313 = pneg %p67
        %p314 = pneg %p64
        %p315 = pneg %p88
        %p316 = pneg %p85
        %p317 = pneg %p109
        %p318 = pneg %p106
        %p319 = pneg %p130
        %p320 = pneg %p127
        %p321 = pneg %p151
        %p322 = pneg %p148
        %p323 = pneg %p172
        %p324 = pneg %p169
        %p325 = pneg %p198
        %p326 = pneg %p195
        %s327 = sand.u32 %s185, 1
        %s328 = scalar_lea.sflag [#allocation4], %s327
        %s329 = sand.u32 %s185, 1
        %s330 = smul.addr %s329, 16
        %s331 = scalar_lea.vmem [#allocation8], %s330
        %s332 = smul.u32 2, %s25
        %s333 = smul.u32 2, %s25
        %v334 = vld [vmem:[%s290] sm:$0xff]
        %v335 = vld [vmem:[%s290 + $0x8] sm:$0xff]
        %v336 = vpack.c.bf16 %v335, %v334
        %v337 = vld [vmem:[#allocation5] sm:$0xf]
        %v338 = vld [vmem:[#allocation5 + $0x4] sm:$0xf]
        %v339 = vld [vmem:[#allocation5 + $0x8] sm:$0xf]
        %v340 = vld [vmem:[#allocation5 + $0xc] sm:$0xf]
        %v341 = vld [vmem:[#allocation5 + $0x10] sm:$0xf]
        %v342 = vld [vmem:[#allocation5 + $0x14] sm:$0xf]
        %v343 = vld [vmem:[#allocation5 + $0x18] sm:$0xf]
        %v344 = vld [vmem:[#allocation5 + $0x1c] sm:$0xf]
        %v345 = vld [vmem:[#allocation5 + $0x20] sm:$0xf]
        %v346 = vld [vmem:[#allocation5 + $0x24] sm:$0xf]
        %v347 = vld [vmem:[#allocation5 + $0x28] sm:$0xf]
        %v348 = vld [vmem:[#allocation5 + $0x2c] sm:$0xf]
        %v349 = vld [vmem:[#allocation5 + $0x30] sm:$0xf]
        %v350 = vld [vmem:[#allocation5 + $0x34] sm:$0xf]
        %v351 = vld [vmem:[#allocation5 + $0x38] sm:$0xf]
        %v352 = vld [vmem:[#allocation5 + $0x3c] sm:$0xf]
        %v353 = vld [vmem:[%s2] sm:$0x1]
        %v355 = vperm.slane %v353, 0
        %v373 = vunpack.c.l.b16 %v337
        %v374 = vunpack.c.l.b16 %v338
        %v375 = vunpack.c.l.b16 %v339
        %v376 = vunpack.c.l.b16 %v340
        %v377 = vunpack.c.l.b16 %v341
        %v378 = vunpack.c.l.b16 %v342
        %v379 = vunpack.c.l.b16 %v343
        %v380 = vunpack.c.l.b16 %v344
        %v381 = vunpack.c.l.b16 %v345
        %v382 = vunpack.c.l.b16 %v346
        %v383 = vunpack.c.l.b16 %v347
        %v384 = vunpack.c.l.b16 %v348
        %v385 = vunpack.c.l.b16 %v349
        %v386 = vunpack.c.l.b16 %v350
        %v387 = vunpack.c.l.b16 %v351
        %v388 = vunpack.c.l.b16 %v352
        %v389 = vpack.c.b16 %v374, %v373
        %v390 = vpack.c.b16 %v376, %v375
        %v391 = vpack.c.b16 %v378, %v377
        %v392 = vpack.c.b16 %v380, %v379
        %v393 = vpack.c.b16 %v382, %v381
        %v394 = vpack.c.b16 %v384, %v383
        %v395 = vpack.c.b16 %v386, %v385
        %v396 = vpack.c.b16 %v388, %v387
        %405 = vmatpush.bf16.msra.mxu0 %v396
        %406 = vmatpush.bf16.msra.mxu0 %v395
        %407 = vmatpush.bf16.msra.mxu0 %v394
        %408 = vmatpush.bf16.msra.mxu0 %v393
        %409 = vmatpush.bf16.msra.mxu0 %v392
        %410 = vmatpush.bf16.msra.mxu0 %v391
        %411 = vmatpush.bf16.msra.mxu0 %v390
        %412 = vmatpush.bf16.msra.mxu0 %v389
        %413 = vmatmul.bf16.gmra.mxu0 %v336
        %v414 = vpop.f32.mrf.mxu0
        %v415 = vadd.f32 %v355, %v414
        %v416 = vpop.f32.mrf.mxu0
        %v417 = vadd.f32 %v355, %v416
        %418 = vdwg.mxu0
        %v419 = vmax.f32 %v415, 0.0
        %v420 = vmax.f32 %v417, 0.0
        %v421 = vpack.c.bf16 %v420, %v419
        %v422 = vld [vmem:[#allocation7] sm:$0xf]
        %v423 = vld [vmem:[#allocation7 + $0x4] sm:$0xf]
        %v424 = vld [vmem:[#allocation7 + $0x8] sm:$0xf]
        %v425 = vld [vmem:[#allocation7 + $0xc] sm:$0xf]
        %v426 = vld [vmem:[#allocation7 + $0x10] sm:$0xf]
        %v427 = vld [vmem:[#allocation7 + $0x14] sm:$0xf]
        %v428 = vld [vmem:[#allocation7 + $0x18] sm:$0xf]
        %v429 = vld [vmem:[#allocation7 + $0x1c] sm:$0xf]
        %v430 = vld [vmem:[#allocation7 + $0x20] sm:$0xf]
        %v431 = vld [vmem:[#allocation7 + $0x24] sm:$0xf]
        %v432 = vld [vmem:[#allocation7 + $0x28] sm:$0xf]
        %v433 = vld [vmem:[#allocation7 + $0x2c] sm:$0xf]
        %v434 = vld [vmem:[#allocation7 + $0x30] sm:$0xf]
        %v435 = vld [vmem:[#allocation7 + $0x34] sm:$0xf]
        %v436 = vld [vmem:[#allocation7 + $0x38] sm:$0xf]
        %v437 = vld [vmem:[#allocation7 + $0x3c] sm:$0xf]
        %v438 = vld [vmem:[%s4] sm:$0x1]
        %v440 = vperm.slane %v438, 0
        %v458 = vunpack.c.l.b16 %v422
        %v459 = vunpack.c.l.b16 %v423
        %v460 = vunpack.c.l.b16 %v424
        %v461 = vunpack.c.l.b16 %v425
        %v462 = vunpack.c.l.b16 %v426
        %v463 = vunpack.c.l.b16 %v427
        %v464 = vunpack.c.l.b16 %v428
        %v465 = vunpack.c.l.b16 %v429
        %v466 = vunpack.c.l.b16 %v430
        %v467 = vunpack.c.l.b16 %v431
        %v468 = vunpack.c.l.b16 %v432
        %v469 = vunpack.c.l.b16 %v433
        %v470 = vunpack.c.l.b16 %v434
        %v471 = vunpack.c.l.b16 %v435
        %v472 = vunpack.c.l.b16 %v436
        %v473 = vunpack.c.l.b16 %v437
        %v474 = vpack.c.b16 %v459, %v458
        %v475 = vpack.c.b16 %v461, %v460
        %v476 = vpack.c.b16 %v463, %v462
        %v477 = vpack.c.b16 %v465, %v464
        %v478 = vpack.c.b16 %v467, %v466
        %v479 = vpack.c.b16 %v469, %v468
        %v480 = vpack.c.b16 %v471, %v470
        %v481 = vpack.c.b16 %v473, %v472
        %490 = vmatpush.bf16.msra.mxu0 %v481
        %491 = vmatpush.bf16.msra.mxu0 %v480
        %492 = vmatpush.bf16.msra.mxu0 %v479
        %493 = vmatpush.bf16.msra.mxu0 %v478
        %494 = vmatpush.bf16.msra.mxu0 %v477
        %495 = vmatpush.bf16.msra.mxu0 %v476
        %496 = vmatpush.bf16.msra.mxu0 %v475
        %497 = vmatpush.bf16.msra.mxu0 %v474
        %498 = vmatmul.bf16.gmra.mxu0 %v421
        %v499 = vpop.f32.mrf.mxu0
        %v500 = vadd.f32 %v440, %v499
        %v501 = vpop.f32.mrf.mxu0
        %v502 = vadd.f32 %v440, %v501
        %503 = vdwg.mxu0
        %v504 = vadd.f32 %v500, %v334
        %v505 = vadd.f32 %v502, %v335
        %v506 = vld [vmem:[%s5] sm:$0x1]
        %v507 = vld [vmem:[%s6] sm:$0x1]
        %v508 = vlaneseq
        %v509 = vand.u32 %v508, 127
        %vm510 = vcmp.lt.s32.totalorder %v509, 32
        %v511 = vsel %vm510, %v504, 0.0
        %v512 = vsel %vm510, %v505, 0.0
        %513 = vadd.xlane.f32.xlu0 %v511
        %v514 = vpop.xlane.xlu0 %513
        %515 = vadd.xlane.f32.xlu0 %v512
        %v516 = vpop.xlane.xlu0 %515
        %v517 = vmul.f32 %v514, 0.03125
        %v518 = vmul.f32 %v516, 0.03125
        %v519 = vsub.f32 %v504, %v517
        %v520 = vsub.f32 %v505, %v518
        %v521 = vsel %vm510, %v519, 0.0
        %v522 = vsel %vm510, %v520, 0.0
        %v523 = vmul.f32 %v521, %v521
        %v524 = vmul.f32 %v522, %v522
        %525 = vadd.xlane.f32.xlu0 %v523
        %v526 = vpop.xlane.xlu0 %525
        %527 = vadd.xlane.f32.xlu0 %v524
        %v528 = vpop.xlane.xlu0 %527
        %v529 = vmul.f32 %v526, 0.032258064
        %v530 = vmul.f32 %v528, 0.032258064
        %v531 = vrsqrt.pop %v529
        %v532 = vmul.f32 %v531, %v529
        %v533 = vmul.f32 %v532, %v531
        %v534 = vmul.f32 0.5, %v533
        %v535 = vsub.f32 1.5, %v534
        %v536 = vmul.f32 %v531, %v535
        %v537 = vmul.f32 %v529, %v536
        %vm538 = vcmp.eq.f32.partialorder %v529, inf
        %v539 = vsel %vm538, %v529, %v537
        %vm540 = vcmp.eq.f32.partialorder %v529, 0.0
        %v541 = vand.u32 %v529, 2147483648
        %v542 = vsel %vm540, %v541, %v539
        %v543 = vrsqrt.pop %v530
        %v544 = vmul.f32 %v543, %v530
        %v545 = vmul.f32 %v544, %v543
        %v546 = vmul.f32 0.5, %v545
        %v547 = vsub.f32 1.5, %v546
        %v548 = vmul.f32 %v543, %v547
        %v549 = vmul.f32 %v530, %v548
        %vm550 = vcmp.eq.f32.partialorder %v530, inf
        %v551 = vsel %vm550, %v530, %v549
        %vm552 = vcmp.eq.f32.partialorder %v530, 0.0
        %v553 = vand.u32 %v530, 2147483648
        %v554 = vsel %vm552, %v553, %v551
        %v555 = vadd.f32 %v542, 1e-06
        %v556 = vadd.f32 %v554, 1e-06
        %v557 = vrcp.pop %v555
        %v558 = vrcp.pop %v556
        %v560 = vperm.slane %v506, 0
        %v562 = vmul.f32 %v560, %v557
        %v563 = vmul.f32 %v560, %v558
        %v564 = vmul.f32 %v521, %v562
        %v565 = vmul.f32 %v522, %v563
        %v567 = vperm.slane %v507, 0
        %v569 = vadd.f32 %v564, %v567
        %v570 = vadd.f32 %v565, %v567
        %571 = vst [vmem:[%s331] sm:$0xff] %v569
        %572 = vst [vmem:[%s331 + $0x8] sm:$0xff] %v570
        %s573 = sand.u32 %s185, 1
        %s574 = scalar_lea.sflag [#allocation4], %s573
        %s575 = sand.u32 %s185, 1
        %s576 = smul.addr %s575, 16
        %s577 = scalar_lea.vmem [#allocation8], %s576
        // Predicated region
        $region61: #{tpu_custom_call.1} parent=47 // pred_check
          %p578 = pneg %p195
        $region62: #{tpu_custom_call.1} parent=47 // pred_check_branch
          %580 = sbr.rel (%p578) target = $region64
        $region63: #{tpu_custom_call.1} parent=47 // pred_region
          %s581 = smul.u32 2, %s25
          %583 = vsyncadd %s574, 0
          %s584 = smul.addr %s581, 8
          %s585 = scalar_lea.hbm %s7, %s584
          %s586 = sshll.u32 %s577, 4
          %s587 = int_to_ptr.vmem [resolvable:$true] %s586
          %s588 = sshll.u32 %s585, 4
          %s589 = int_to_ptr.hbm [resolvable:$true] %s588
          %594 = dma.vmem_to_hbm [thread:$0]  %s587, 256, %s589, %s574, 128, 128, 8
        $region64: #{tpu_custom_call.1} parent=47 // pred_fallthru
          _
      $region48: #{tpu_custom_call.1} parent=5 // pred_fallthru
        _
      %p595 = scmp.le.s32.totalorder 2, %s20
      // Predicated region
      $region65: #{tpu_custom_call.1} parent=5 // pred_check
        %p596 = pneg %p595
      $region66: #{tpu_custom_call.1} parent=5 // pred_check_branch
        %598 = sbr.rel (%p596) target = $region68
      $region67: #{tpu_custom_call.1} parent=5 // pred_region
        %s599 = ssub.s32 %s20, 2
        // Predicated region
        $region69: #{tpu_custom_call.1} parent=67 // pred_check
          %p600 = pneg %p201
        $region70: #{tpu_custom_call.1} parent=67 // pred_check_branch
          %602 = sbr.rel (%p600) target = $region72
        $region71: #{tpu_custom_call.1} parent=67 // pred_region
          %s603 = sand.u32 %s186, 1
          %s604 = scalar_lea.sflag [#allocation4], %s603
          %s605 = sand.u32 %s186, 1
          %s606 = smul.addr %s605, 16
          %s607 = scalar_lea.vmem [#allocation8], %s606
          %609 = dma.done %s604, 256
        $region72: #{tpu_custom_call.1} parent=67 // pred_fallthru
          _
      $region68: #{tpu_custom_call.1} parent=5 // pred_fallthru
        _
    $region6: #{tpu_custom_call.1} parent=1 // loop_footer
      %s24 = sadd.s32 1, %s20
    $region7: #{tpu_custom_call.1} parent=1 // loop_footer_branch
      %19 = sbr.rel target = $region3
    $region8: #{tpu_custom_call.1} parent=1 // loop_exit
      _
    %610 = vsyncpa [#allocation3], 1
    %s611 = scalar_lea.sflag [#allocation3], 1
    %612 = vsyncpa %s611, 1
    %613 = vsyncpa [#allocation6], 1
    %614 = vsyncpa [#allocation4], 1
    %s615 = scalar_lea.sflag [#allocation4], 1
    %616 = vsyncpa %s615, 1

</llo_original>
